<compile_context>
chip_gen: v7x
topology: tpu7x:2x2x1
jax: 0.10.0
libtpu: 0.0.40
codegen_flags: <defaults>
</compile_context>

<pallas_src>
import math
import functools

import jax
import jax.numpy as jnp
from jax import lax
from jax.experimental import pallas as pl
from jax.experimental.pallas import tpu as pltpu

N_EMBD = 384          # module's n_embd
BLOCK_SIZE = 256      # module's causal-mask buffer size (only T <= block_size used)


def head_kernel(x_ref, w_ref, o_ref, *, head_size):
    """One grid step = one batch element.

    x_ref : (1, T, C)   VMEM, bf16
    w_ref : (C, 3H)     VMEM, bf16  (fused [Wk | Wq | Wv], resident across grid)
    o_ref : (1, T, H)   VMEM, f32
    """
    x = x_ref[0]                    # (T, C) bf16
    w = w_ref[...]                  # (C, 3H) bf16

    # Fused K/Q/V projection: single MXU matmul, f32 accumulation.
    kqv = jnp.dot(x, w, preferred_element_type=jnp.float32)      # (T, 3H) f32

    H = head_size
    k = kqv[:, :H]                  # (T, H) f32
    q = kqv[:, H:2 * H]
    v = kqv[:, 2 * H:]

    # Scale q (T*H elements) rather than wei (T*T elements); cast back to bf16
    # so the score matmul runs at bf16 MXU rate.
    scale = H ** (-0.5)
    q_bf = (q * scale).astype(jnp.bfloat16)
    k_bf = k.astype(jnp.bfloat16)

    # q @ k^T as a contraction on H of both operands — no explicit transpose.
    wei = lax.dot_general(
        q_bf, k_bf,
        dimension_numbers=(((1,), (1,)), ((), ())),
        preferred_element_type=jnp.float32)                      # (T, T) f32

    # Causal mask (tril): j > i -> -inf, matching masked_fill(tril==0, -inf).
    T = wei.shape[0]
    row = lax.broadcasted_iota(jnp.int32, (T, T), 0)
    col = lax.broadcasted_iota(jnp.int32, (T, T), 1)
    wei = jnp.where(col <= row, wei, -jnp.inf)

    # Numerically stable softmax; row-sum reciprocal on the EUP (approx).
    m = jnp.max(wei, axis=-1, keepdims=True)
    e = jnp.exp(wei - m)
    inv_den = pl.reciprocal(jnp.sum(e, axis=-1, keepdims=True), approx=True)
    p = e * inv_den

    # Dropout is identity in eval mode.

    # Weighted sum of values (bf16 operands, f32 accumulate).
    out = jnp.dot(p.astype(jnp.bfloat16), v.astype(jnp.bfloat16),
                  preferred_element_type=jnp.float32)            # (T, H) f32
    o_ref[0] = out.astype(o_ref.dtype)


def head_forward(x, wk, wq, wv):
    """x: (B, T, C) f32; wk/wq/wv: (C, H) f32.  Returns (B, T, H) f32."""
    B, T, C = x.shape
    H = wk.shape[1]

    # Fuse the three projection weights into one (C, 3H) slab and cast MXU
    # operands to bf16 on the host side (halves HBM->VMEM traffic).
    w_kqv = jnp.concatenate([wk, wq, wv], axis=1).astype(jnp.bfloat16)
    x_bf = x.astype(jnp.bfloat16)

    kernel = functools.partial(head_kernel, head_size=H)
    return pl.pallas_call(
        kernel,
        out_shape=jax.ShapeDtypeStruct((B, T, H), jnp.float32),
        grid=(B,),
        in_specs=[
            pl.BlockSpec((1, T, C), lambda b: (b, 0, 0)),     # one batch element
            pl.BlockSpec((C, 3 * H), lambda b: (0, 0)),       # fused weights, resident
        ],
        out_specs=pl.BlockSpec((1, T, H), lambda b: (b, 0, 0)),
        compiler_params=pltpu.CompilerParams(
            dimension_semantics=("parallel",)),
    )(x_bf, w_kqv)


def reference_forward(x, wk, wq, wv):
    """Pure-JAX f32 reference mirroring the PyTorch forward (eval mode)."""
    k = x @ wk
    q = x @ wq
    v = x @ wv
    H = wk.shape[1]
    wei = (q @ jnp.swapaxes(k, -2, -1)) * (H ** -0.5)
    T = x.shape[1]
    mask = jnp.tril(jnp.ones((T, T), dtype=bool))
    wei = jnp.where(mask, wei, -jnp.inf)
    wei = jax.nn.softmax(wei, axis=-1)
    return wei @ v


if __name__ == "__main__":
    # Small, deterministic example shapes consistent with the module:
    # batch=2, seq=8 (<= block_size=256), channels=n_embd=384, head_size=64.
    B, T, C, H = 2, 8, N_EMBD, 64

    key = jax.random.PRNGKey(0)
    kx, kk, kq, kv = jax.random.split(key, 4)

    x = jax.random.normal(kx, (B, T, C), dtype=jnp.float32)
    # nn.Linear(n_embd, head_size, bias=False) weights, stored transposed (C, H).
    init_scale = 1.0 / math.sqrt(C)
    wk = jax.random.uniform(kk, (C, H), jnp.float32, -init_scale, init_scale)
    wq = jax.random.uniform(kq, (C, H), jnp.float32, -init_scale, init_scale)
    wv = jax.random.uniform(kv, (C, H), jnp.float32, -init_scale, init_scale)

    out = head_forward(x, wk, wq, wv)
    out = jax.block_until_ready(out)

    ref = reference_forward(x, wk, wq, wv)
    assert out.shape == (B, T, H)
    # bf16 MXU operands + approx reciprocal -> compare with mixed-precision tolerance.
    assert jnp.allclose(out, ref, atol=3e-2, rtol=3e-2), "mismatch vs reference"

    print("KERNEL_OK")
</pallas_src>

<mosaic_0001>
module attributes {stable_mosaic.version = 11 : i64} {
  func.func @head_kernel(%arg0: i32, %arg1: memref<1x8x384xbf16, #tpu.memory_space<vmem>>, %arg2: memref<384x192xbf16, #tpu.memory_space<vmem>>, %arg3: memref<1x8x64xf32, #tpu.memory_space<vmem>>) attributes {dimension_semantics = [#tpu.dimension_semantics<parallel>], iteration_bounds = array<i64: 2>, scalar_prefetch = 0 : i64, scratch_operands = 0 : i64, tpu.core_type = #tpu.core_type<tc>, window_params = [{transform_indices = @transform_0, window_bounds = array<i64: 1, 8, 384>}, {pipeline_mode = #tpu.pipeline_mode<synchronous>, transform_indices = @transform_1, window_bounds = array<i64: 384, 192>}, {transform_indices = @transform_2, window_bounds = array<i64: 1, 8, 64>}]} {
    %c0 = arith.constant 0 : index
    %c0_0 = arith.constant 0 : index
    %c0_1 = arith.constant 0 : index
    %0 = vector.load %arg1[%c0, %c0_0, %c0_1] : memref<1x8x384xbf16, #tpu.memory_space<vmem>>, vector<1x8x384xbf16>
    %1 = vector.shape_cast %0 : vector<1x8x384xbf16> to vector<8x384xbf16>
    %c0_2 = arith.constant 0 : index
    %c0_3 = arith.constant 0 : index
    %2 = vector.load %arg2[%c0_2, %c0_3] : memref<384x192xbf16, #tpu.memory_space<vmem>>, vector<384x192xbf16>
    %cst = arith.constant dense<0.000000e+00> : vector<8x192xf32>
    %3 = tpu.matmul %1, %2, %cst {dimension_numbers = #tpu.dot_dimension_numbers<[1], [0], [0], [1], [0, 0, 1, 1], [], []>} : vector<8x384xbf16>, vector<384x192xbf16>, vector<8x192xf32> -> vector<8x192xf32>
    %4 = vector.extract_strided_slice %3 {offsets = [0, 0], sizes = [8, 64], strides = [1, 1]} : vector<8x192xf32> to vector<8x64xf32>
    %5 = vector.extract_strided_slice %3 {offsets = [0, 64], sizes = [8, 64], strides = [1, 1]} : vector<8x192xf32> to vector<8x64xf32>
    %6 = vector.extract_strided_slice %3 {offsets = [0, 128], sizes = [8, 64], strides = [1, 1]} : vector<8x192xf32> to vector<8x64xf32>
    %cst_4 = arith.constant 1.250000e-01 : f32
    %7 = vector.broadcast %cst_4 : f32 to vector<8x64xf32>
    %8 = arith.mulf %5, %7 : vector<8x64xf32>
    %9 = arith.truncf %8 : vector<8x64xf32> to vector<8x64xbf16>
    %10 = arith.truncf %4 : vector<8x64xf32> to vector<8x64xbf16>
    %cst_5 = arith.constant dense<0.000000e+00> : vector<8x8xf32>
    %11 = tpu.matmul %9, %10, %cst_5 {dimension_numbers = #tpu.dot_dimension_numbers<[1], [1], [0], [0], [0, 0, 1, 0], [], []>} : vector<8x64xbf16>, vector<8x64xbf16>, vector<8x8xf32> -> vector<8x8xf32>
    %12 = tpu.iota {dimensions = array<i32: 0>} : vector<8x8xi32>
    %13 = tpu.iota {dimensions = array<i32: 1>} : vector<8x8xi32>
    %14 = arith.cmpi sle, %13, %12 : vector<8x8xi32>
    %cst_6 = arith.constant 0xFF800000 : f32
    %15 = vector.broadcast %cst_6 : f32 to vector<8x8xf32>
    %16 = arith.select %14, %11, %15 : vector<8x8xi1>, vector<8x8xf32>
    %cst_7 = arith.constant dense<0xFF800000> : vector<8xf32>
    %17 = vector.multi_reduction <maximumf>, %16, %cst_7 [1] : vector<8x8xf32> to vector<8xf32>
    %18 = vector.shape_cast %17 : vector<8xf32> to vector<8x1xf32>
    %19 = vector.broadcast %18 : vector<8x1xf32> to vector<8x8xf32>
    %20 = arith.subf %16, %19 : vector<8x8xf32>
    %21 = math.exp %20 : vector<8x8xf32>
    %cst_8 = arith.constant dense<0.000000e+00> : vector<8xf32>
    %22 = vector.multi_reduction <add>, %21, %cst_8 [1] : vector<8x8xf32> to vector<8xf32>
    %23 = vector.shape_cast %22 : vector<8xf32> to vector<8x1xf32>
    %24 = tpu.reciprocal %23 {approx = true} : vector<8x1xf32> -> vector<8x1xf32>
    %25 = vector.broadcast %24 : vector<8x1xf32> to vector<8x8xf32>
    %26 = arith.mulf %21, %25 : vector<8x8xf32>
    %27 = arith.truncf %26 : vector<8x8xf32> to vector<8x8xbf16>
    %28 = arith.truncf %6 : vector<8x64xf32> to vector<8x64xbf16>
    %cst_9 = arith.constant dense<0.000000e+00> : vector<8x64xf32>
    %29 = tpu.matmul %27, %28, %cst_9 {dimension_numbers = #tpu.dot_dimension_numbers<[1], [0], [0], [1], [0, 0, 1, 1], [], []>} : vector<8x8xbf16>, vector<8x64xbf16>, vector<8x64xf32> -> vector<8x64xf32>
    %c0_10 = arith.constant 0 : index
    %c0_11 = arith.constant 0 : index
    %c0_12 = arith.constant 0 : index
    %30 = vector.load %arg3[%c0_10, %c0_11, %c0_12] : memref<1x8x64xf32, #tpu.memory_space<vmem>>, vector<1x8x64xf32>
    %31 = vector.shape_cast %30 : vector<1x8x64xf32> to vector<8x64xf32>
    %32 = vector.shape_cast %29 : vector<8x64xf32> to vector<1x8x64xf32>
    tpu.vector_store %arg3[%c0_10, %c0_11, %c0_12], %32 {strides = array<i32>} : memref<1x8x64xf32, #tpu.memory_space<vmem>>, vector<1x8x64xf32>,
    return
  }
  func.func @transform_0(%arg0: i32) -> (i32, i32, i32) {
    %c0_i32 = arith.constant 0 : i32
    %c0_i32_0 = arith.constant 0 : i32
    %c0_i32_1 = arith.constant 0 : i32
    return %arg0, %c0_i32, %c0_i32_0 : i32, i32, i32
  }
  func.func @transform_1(%arg0: i32) -> (i32, i32) {
    %c0_i32 = arith.constant 0 : i32
    %c0_i32_0 = arith.constant 0 : i32
    %c0_i32_1 = arith.constant 0 : i32
    return %c0_i32, %c0_i32_0 : i32, i32
  }
  func.func @transform_2(%arg0: i32) -> (i32, i32, i32) {
    %c0_i32 = arith.constant 0 : i32
    %c0_i32_0 = arith.constant 0 : i32
    %c0_i32_1 = arith.constant 0 : i32
    return %arg0, %c0_i32, %c0_i32_0 : i32, i32, i32
  }
}

</mosaic_0001>

<llo_original>
// kernel: tpu_custom_call.1
$region0: #{tpu_custom_call.1}
  #allocation0 [shape = 'u32[]', space=smem, size = 0x4, offset = 0x4, fixed_abs, tag = 'smem constant byte address 0x4 - core index']
  #allocation1 [shape = 'u32[144,128]{1,0:T(1,128)}', space=vmem, size = 0x12000, scoped, tag = 'internal scratch']
  %s0 = inlined_call_operand.vmem [shape: bf16[2,8,384], index: 0, kind: input, shape index: {}]
  %s1 = inlined_call_operand.vmem [shape: bf16[384,192], index: 1, kind: input, shape index: {}]
  %s2 = inlined_call_operand.hbm [shape: f32[2,8,64], index: 2, kind: output, shape index: {}]
  %s3 = sld [smem:[#allocation0]]
  $region41: #{tpu_custom_call.1} parent=0
    _
  %s5 = ssub.s32 1, %s3
  %s6 = scalar_select 0, %s5, %s3
  $region1: #{tpu_custom_call.1} parent=0
    #allocation2 [shape = 'u8[8192]{0}', space=vmem, size = 0x2000, scoped, tag = 'output window, operand 0']
    #allocation3 [shape = 's32[2]{0}', space=sflag, size = 0x8, scoped, tag = 'scoped memory for tpu_custom_call.1']
    %7 = vsyncpa [#allocation3], 0
    %s8 = scalar_lea.sflag [#allocation3], 1
    %9 = vsyncpa %s8, 0
    loop: start=0, step=1, limit=4
    $region2: #{tpu_custom_call.1} parent=1 // loop_pre_header
      _
    $region3: #{tpu_custom_call.1} parent=1 // loop_header
      %s11 = sphi 0, %s15
      %p12 = scmp.ge.s32.totalorder %s11, 4
      %s21 = sphi 0, %s23
      %s24 = sphi 0, %s21
      %s25 = sphi 0, %s24
      %s41 = sphi 0, %s25
      %s45 = sphi 0, %s45
      %s47 = sphi 0, %s45
      %s48 = sphi 0, %s47
      %s62 = sphi 0, %s48
      %s68 = sphi 0, %s70
      %s71 = sphi 0, %s68
      %s72 = sphi 0, %s71
      %s88 = sphi 0, %s72
    $region4: #{tpu_custom_call.1} parent=1 // loop_header_branch
      %14 = sbr.rel (%p12) target = $region8
    $region5: #{tpu_custom_call.1} parent=1 // loop_body
      %s16 = ssub.s32 %s11, 1
      %s17 = ssub.s32 %s11, 2
      %s18 = sadd.s32 %s11, 1
      %s19 = ssub.s32 %s11, %s18
      %p20 = scmp.eq.s32.totalorder %s19, 0
      %s22 = sadd.s32 %s21, 1
      %s23 = scalar_select %p20, %s21, %s22
      %p26 = pneg %p20
      %p27 = scmp.eq.s32.totalorder %s11, 1
      %p28 = por %p26, %p27
      %p29 = scmp.ne.s32.totalorder %s21, %s24
      %p30 = scmp.eq.s32.totalorder %s11, 0
      %p31 = por %p29, %p30
      %p32 = scmp.ne.s32.totalorder %s21, %s24
      %p33 = scmp.eq.s32.totalorder %s16, 1
      %p34 = por %p32, %p33
      %p35 = scmp.ne.s32.totalorder %s24, %s25
      %p36 = scmp.eq.s32.totalorder %s16, 0
      %p37 = por %p35, %p36
      %p38 = scmp.ne.s32.totalorder %s24, %s25
      %p39 = scmp.eq.s32.totalorder %s17, 1
      %p40 = por %p38, %p39
      %p42 = scmp.ne.s32.totalorder %s25, %s41
      %p43 = scmp.eq.s32.totalorder %s17, 0
      %p44 = por %p42, %p43
      %s46 = sadd.s32 %s45, 1
      %p49 = scmp.eq.s32.totalorder %s11, 1
      %p50 = scmp.ne.s32.totalorder %s45, %s47
      %p51 = scmp.eq.s32.totalorder %s11, 0
      %p52 = por %p50, %p51
      %p53 = scmp.ne.s32.totalorder %s45, %s47
      %p54 = scmp.eq.s32.totalorder %s16, 1
      %p55 = por %p53, %p54
      %p56 = scmp.ne.s32.totalorder %s47, %s48
      %p57 = scmp.eq.s32.totalorder %s16, 0
      %p58 = por %p56, %p57
      %p59 = scmp.ne.s32.totalorder %s47, %s48
      %p60 = scmp.eq.s32.totalorder %s17, 1
      %p61 = por %p59, %p60
      %p63 = scmp.ne.s32.totalorder %s48, %s62
      %p64 = scmp.eq.s32.totalorder %s17, 0
      %p65 = por %p63, %p64
      %s66 = ssub.s32 %s11, %s18
      %p67 = scmp.eq.s32.totalorder %s66, 0
      %s69 = sadd.s32 %s68, 1
      %s70 = scalar_select %p67, %s68, %s69
      %p73 = pneg %p67
      %p74 = scmp.eq.s32.totalorder %s11, 1
      %p75 = por %p73, %p74
      %p76 = scmp.ne.s32.totalorder %s68, %s71
      %p77 = scmp.eq.s32.totalorder %s11, 0
      %p78 = por %p76, %p77
      %p79 = scmp.ne.s32.totalorder %s68, %s71
      %p80 = scmp.eq.s32.totalorder %s16, 1
      %p81 = por %p79, %p80
      %p82 = scmp.ne.s32.totalorder %s71, %s72
      %p83 = scmp.eq.s32.totalorder %s16, 0
      %p84 = por %p82, %p83
      %p85 = scmp.ne.s32.totalorder %s71, %s72
      %p86 = scmp.eq.s32.totalorder %s17, 1
      %p87 = por %p85, %p86
      %p89 = scmp.ne.s32.totalorder %s72, %s88
      %p90 = scmp.eq.s32.totalorder %s17, 0
      %p91 = por %p89, %p90
      %p92 = scmp.le.s32.totalorder 1, %s11
      %p93 = scmp.lt.s32.totalorder %s11, 3
      %p94 = pnand %p92, %p93
      %p95 = pneg %p94
      // Predicated region
      $region9: #{tpu_custom_call.1} parent=5 // pred_check
        _
      $region10: #{tpu_custom_call.1} parent=5 // pred_check_branch
        %97 = sbr.rel (%p94) target = $region12
      $region11: #{tpu_custom_call.1} parent=5 // pred_region
        %s98 = ssub.s32 %s11, 1
        // Predicated region
        $region13: #{tpu_custom_call.1} parent=11 // pred_check
          %p99 = pneg %p58
        $region14: #{tpu_custom_call.1} parent=11 // pred_check_branch
          %101 = sbr.rel (%p99) target = $region16
        $region15: #{tpu_custom_call.1} parent=11 // pred_region
          _
        $region16: #{tpu_custom_call.1} parent=11 // pred_fallthru
          _
      $region12: #{tpu_custom_call.1} parent=5 // pred_fallthru
        _
      %p102 = scmp.lt.s32.totalorder %s11, 2
      // Predicated region
      $region17: #{tpu_custom_call.1} parent=5 // pred_check
        %p103 = pneg %p102
      $region18: #{tpu_custom_call.1} parent=5 // pred_check_branch
        %105 = sbr.rel (%p103) target = $region20
      $region19: #{tpu_custom_call.1} parent=5 // pred_region
        // Predicated region
        $region21: #{tpu_custom_call.1} parent=19 // pred_check
          %p106 = pneg %p31
        $region22: #{tpu_custom_call.1} parent=19 // pred_check_branch
          %108 = sbr.rel (%p106) target = $region24
        $region23: #{tpu_custom_call.1} parent=19 // pred_region
          %p109 = scmp.lt.s32.totalorder %s11, 1
          %s110 = scalar_select %p109, %s11, 1
          %s111 = smul.addr %s110, 3
          %s112 = smul.addr %s111, 4
          %s113 = scalar_lea.vmem %s0, %s112
        $region24: #{tpu_custom_call.1} parent=19 // pred_fallthru
          _
      $region20: #{tpu_custom_call.1} parent=5 // pred_fallthru
        _
      %p114 = scmp.le.s32.totalorder 1, %s11
      %p115 = scmp.lt.s32.totalorder %s11, 3
      %p116 = pnand %p114, %p115
      %p117 = pneg %p116
      // Predicated region
      $region25: #{tpu_custom_call.1} parent=5 // pred_check
        _
      $region26: #{tpu_custom_call.1} parent=5 // pred_check_branch
        %119 = sbr.rel (%p116) target = $region28
      $region27: #{tpu_custom_call.1} parent=5 // pred_region
        %s120 = ssub.s32 %s11, 1
        %p121 = scmp.lt.s32.totalorder %s16, 1
        %s122 = scalar_select %p121, %s16, 1
        %s123 = smul.addr %s122, 3
        %s124 = smul.addr %s123, 4
        %s125 = scalar_lea.vmem %s0, %s124
        %p126 = pneg %p37
        %p127 = pneg %p34
        %p128 = pneg %p58
        %p129 = pneg %p55
        %p130 = pneg %p84
        %p131 = pneg %p81
        %s132 = sand.u32 %s71, 1
        %s133 = scalar_lea.sflag [#allocation3], %s132
        %s134 = sand.u32 %s71, 1
        %s135 = smul.addr %s134, 8
        %s136 = scalar_lea.vmem [#allocation2], %s135
        %p137 = scmp.lt.s32.totalorder %s16, 1
        %s138 = scalar_select %p137, %s16, 1
        %s139 = smul.addr %s138, 3
        %s140 = smul.addr %s139, 4
        %s141 = scalar_lea.vmem %s0, %s140
        %v143 = vld [vmem:[%s141] sm:$0xff]
        %v144 = vld [vmem:[%s141 + $0x8] sm:$0xf]
        %v145 = vld [vmem:[%s1] sm:$0xff]
        %v146 = vld [vmem:[%s1 + $0x8] sm:$0xff]
        %v147 = vld [vmem:[%s1 + $0x10] sm:$0xff]
        %v148 = vld [vmem:[%s1 + $0x18] sm:$0xff]
        %v149 = vld [vmem:[%s1 + $0x20] sm:$0xff]
        %v150 = vld [vmem:[%s1 + $0x28] sm:$0xff]
        %v151 = vld [vmem:[%s1 + $0x30] sm:$0xff]
        %v152 = vld [vmem:[%s1 + $0x38] sm:$0xff]
        %v153 = vld [vmem:[%s1 + $0x40] sm:$0xff]
        %v154 = vld [vmem:[%s1 + $0x48] sm:$0xff]
        %v155 = vld [vmem:[%s1 + $0x50] sm:$0xff]
        %v156 = vld [vmem:[%s1 + $0x58] sm:$0xff]
        %v157 = vld [vmem:[%s1 + $0x60] sm:$0xff]
        %v158 = vld [vmem:[%s1 + $0x68] sm:$0xff]
        %v159 = vld [vmem:[%s1 + $0x70] sm:$0xff]
        %v160 = vld [vmem:[%s1 + $0x78] sm:$0xff]
        %v161 = vld [vmem:[%s1 + $0x80] sm:$0xff]
        %v162 = vld [vmem:[%s1 + $0x88] sm:$0xff]
        %v163 = vld [vmem:[%s1 + $0x90] sm:$0xff]
        %v164 = vld [vmem:[%s1 + $0x98] sm:$0xff]
        %v165 = vld [vmem:[%s1 + $0xa0] sm:$0xff]
        %v166 = vld [vmem:[%s1 + $0xa8] sm:$0xff]
        %v167 = vld [vmem:[%s1 + $0xb0] sm:$0xff]
        %v168 = vld [vmem:[%s1 + $0xb8] sm:$0xff]
        %v169 = vld [vmem:[%s1 + $0xc0] sm:$0xff]
        %v170 = vld [vmem:[%s1 + $0xc8] sm:$0xff]
        %v171 = vld [vmem:[%s1 + $0xd0] sm:$0xff]
        %v172 = vld [vmem:[%s1 + $0xd8] sm:$0xff]
        %v173 = vld [vmem:[%s1 + $0xe0] sm:$0xff]
        %v174 = vld [vmem:[%s1 + $0xe8] sm:$0xff]
        %v175 = vld [vmem:[%s1 + $0xf0] sm:$0xff]
        %v176 = vld [vmem:[%s1 + $0xf8] sm:$0xff]
        %v177 = vld [vmem:[%s1 + $0x100] sm:$0xff]
        %v178 = vld [vmem:[%s1 + $0x108] sm:$0xff]
        %v179 = vld [vmem:[%s1 + $0x110] sm:$0xff]
        %v180 = vld [vmem:[%s1 + $0x118] sm:$0xff]
        %v181 = vld [vmem:[%s1 + $0x120] sm:$0xff]
        %v182 = vld [vmem:[%s1 + $0x128] sm:$0xff]
        %v183 = vld [vmem:[%s1 + $0x130] sm:$0xff]
        %v184 = vld [vmem:[%s1 + $0x138] sm:$0xff]
        %v185 = vld [vmem:[%s1 + $0x140] sm:$0xff]
        %v186 = vld [vmem:[%s1 + $0x148] sm:$0xff]
        %v187 = vld [vmem:[%s1 + $0x150] sm:$0xff]
        %v188 = vld [vmem:[%s1 + $0x158] sm:$0xff]
        %v189 = vld [vmem:[%s1 + $0x160] sm:$0xff]
        %v190 = vld [vmem:[%s1 + $0x168] sm:$0xff]
        %v191 = vld [vmem:[%s1 + $0x170] sm:$0xff]
        %v192 = vld [vmem:[%s1 + $0x178] sm:$0xff]
        %v195 = vunpack.c.l.b16 %v143
        %v196 = vunpack.c.h.b16 %v143
        %v197 = vunpack.c.l.b16 %v144
        %v198 = vpack.c.b16 %v195, %v195
        %v199 = vpack.c.b16 %v196, %v196
        %v200 = vpack.c.b16 %v197, %v197
        %v252 = vunpack.c.l.b16 %v145
        %v253 = vunpack.c.h.b16 %v145
        %v254 = vunpack.c.l.b16 %v146
        %v255 = vunpack.c.h.b16 %v146
        %v256 = vunpack.c.l.b16 %v147
        %v257 = vunpack.c.h.b16 %v147
        %v258 = vunpack.c.l.b16 %v148
        %v259 = vunpack.c.h.b16 %v148
        %v260 = vunpack.c.l.b16 %v149
        %v261 = vunpack.c.h.b16 %v149
        %v262 = vunpack.c.l.b16 %v150
        %v263 = vunpack.c.h.b16 %v150
        %v264 = vunpack.c.l.b16 %v151
        %v265 = vunpack.c.h.b16 %v151
        %v266 = vunpack.c.l.b16 %v152
        %v267 = vunpack.c.h.b16 %v152
        %v268 = vunpack.c.l.b16 %v153
        %v269 = vunpack.c.h.b16 %v153
        %v270 = vunpack.c.l.b16 %v154
        %v271 = vunpack.c.h.b16 %v154
        %v272 = vunpack.c.l.b16 %v155
        %v273 = vunpack.c.h.b16 %v155
        %v274 = vunpack.c.l.b16 %v156
        %v275 = vunpack.c.h.b16 %v156
        %v276 = vunpack.c.l.b16 %v157
        %v277 = vunpack.c.h.b16 %v157
        %v278 = vunpack.c.l.b16 %v158
        %v279 = vunpack.c.h.b16 %v158
        %v280 = vunpack.c.l.b16 %v159
        %v281 = vunpack.c.h.b16 %v159
        %v282 = vunpack.c.l.b16 %v160
        %v283 = vunpack.c.h.b16 %v160
        %v284 = vunpack.c.l.b16 %v161
        %v285 = vunpack.c.h.b16 %v161
        %v286 = vunpack.c.l.b16 %v162
        %v287 = vunpack.c.h.b16 %v162
        %v288 = vunpack.c.l.b16 %v163
        %v289 = vunpack.c.h.b16 %v163
        %v290 = vunpack.c.l.b16 %v164
        %v291 = vunpack.c.h.b16 %v164
        %v292 = vunpack.c.l.b16 %v165
        %v293 = vunpack.c.h.b16 %v165
        %v294 = vunpack.c.l.b16 %v166
        %v295 = vunpack.c.h.b16 %v166
        %v296 = vunpack.c.l.b16 %v167
        %v297 = vunpack.c.h.b16 %v167
        %v298 = vunpack.c.l.b16 %v168
        %v299 = vunpack.c.h.b16 %v168
        %v300 = vunpack.c.l.b16 %v169
        %v301 = vunpack.c.h.b16 %v169
        %v302 = vunpack.c.l.b16 %v170
        %v303 = vunpack.c.h.b16 %v170
        %v304 = vunpack.c.l.b16 %v171
        %v305 = vunpack.c.h.b16 %v171
        %v306 = vunpack.c.l.b16 %v172
        %v307 = vunpack.c.h.b16 %v172
        %v308 = vunpack.c.l.b16 %v173
        %v309 = vunpack.c.h.b16 %v173
        %v310 = vunpack.c.l.b16 %v174
        %v311 = vunpack.c.h.b16 %v174
        %v312 = vunpack.c.l.b16 %v175
        %v313 = vunpack.c.h.b16 %v175
        %v314 = vunpack.c.l.b16 %v176
        %v315 = vunpack.c.h.b16 %v176
        %v316 = vunpack.c.l.b16 %v177
        %v317 = vunpack.c.h.b16 %v177
        %v318 = vunpack.c.l.b16 %v178
        %v319 = vunpack.c.h.b16 %v178
        %v320 = vunpack.c.l.b16 %v179
        %v321 = vunpack.c.h.b16 %v179
        %v322 = vunpack.c.l.b16 %v180
        %v323 = vunpack.c.h.b16 %v180
        %v324 = vunpack.c.l.b16 %v181
        %v325 = vunpack.c.h.b16 %v181
        %v326 = vunpack.c.l.b16 %v182
        %v327 = vunpack.c.h.b16 %v182
        %v328 = vunpack.c.l.b16 %v183
        %v329 = vunpack.c.h.b16 %v183
        %v330 = vunpack.c.l.b16 %v184
        %v331 = vunpack.c.h.b16 %v184
        %v332 = vunpack.c.l.b16 %v185
        %v333 = vunpack.c.h.b16 %v185
        %v334 = vunpack.c.l.b16 %v186
        %v335 = vunpack.c.h.b16 %v186
        %v336 = vunpack.c.l.b16 %v187
        %v337 = vunpack.c.h.b16 %v187
        %v338 = vunpack.c.l.b16 %v188
        %v339 = vunpack.c.h.b16 %v188
        %v340 = vunpack.c.l.b16 %v189
        %v341 = vunpack.c.h.b16 %v189
        %v342 = vunpack.c.l.b16 %v190
        %v343 = vunpack.c.h.b16 %v190
        %v344 = vunpack.c.l.b16 %v191
        %v345 = vunpack.c.h.b16 %v191
        %v346 = vunpack.c.l.b16 %v192
        %v347 = vunpack.c.h.b16 %v192
        %v348 = vpack.c.b16 %v254, %v252
        %v349 = vpack.c.b16 %v255, %v253
        %v350 = vpack.c.b16 %v258, %v256
        %v351 = vpack.c.b16 %v259, %v257
        %v352 = vpack.c.b16 %v262, %v260
        %v353 = vpack.c.b16 %v263, %v261
        %v354 = vpack.c.b16 %v266, %v264
        %v355 = vpack.c.b16 %v267, %v265
        %v356 = vpack.c.b16 %v270, %v268
        %v357 = vpack.c.b16 %v271, %v269
        %v358 = vpack.c.b16 %v274, %v272
        %v359 = vpack.c.b16 %v275, %v273
        %v360 = vpack.c.b16 %v278, %v276
        %v361 = vpack.c.b16 %v279, %v277
        %v362 = vpack.c.b16 %v282, %v280
        %v363 = vpack.c.b16 %v283, %v281
        %v364 = vpack.c.b16 %v286, %v284
        %v365 = vpack.c.b16 %v287, %v285
        %v366 = vpack.c.b16 %v290, %v288
        %v367 = vpack.c.b16 %v291, %v289
        %v368 = vpack.c.b16 %v294, %v292
        %v369 = vpack.c.b16 %v295, %v293
        %v370 = vpack.c.b16 %v298, %v296
        %v371 = vpack.c.b16 %v299, %v297
        %v372 = vpack.c.b16 %v302, %v300
        %v373 = vpack.c.b16 %v303, %v301
        %v374 = vpack.c.b16 %v306, %v304
        %v375 = vpack.c.b16 %v307, %v305
        %v376 = vpack.c.b16 %v310, %v308
        %v377 = vpack.c.b16 %v311, %v309
        %v378 = vpack.c.b16 %v314, %v312
        %v379 = vpack.c.b16 %v315, %v313
        %v380 = vpack.c.b16 %v318, %v316
        %v381 = vpack.c.b16 %v319, %v317
        %v382 = vpack.c.b16 %v322, %v320
        %v383 = vpack.c.b16 %v323, %v321
        %v384 = vpack.c.b16 %v326, %v324
        %v385 = vpack.c.b16 %v327, %v325
        %v386 = vpack.c.b16 %v330, %v328
        %v387 = vpack.c.b16 %v331, %v329
        %v388 = vpack.c.b16 %v334, %v332
        %v389 = vpack.c.b16 %v335, %v333
        %v390 = vpack.c.b16 %v338, %v336
        %v391 = vpack.c.b16 %v339, %v337
        %v392 = vpack.c.b16 %v342, %v340
        %v393 = vpack.c.b16 %v343, %v341
        %v394 = vpack.c.b16 %v346, %v344
        %v395 = vpack.c.b16 %v347, %v345
        %444 = vmatprep.subr.bf16.mxu0 %v349
        %445 = vmatpush1.bf16.msra.mxu0 %v348
        %446 = vmatprep.subr.bf16.mxu0 %v351
        %447 = vmatpush1.bf16.msra.mxu0 %v350
        %448 = vmatprep.subr.bf16.mxu0 %v353
        %449 = vmatpush1.bf16.msra.mxu0 %v352
        %450 = vmatprep.subr.bf16.mxu0 %v355
        %451 = vmatpush1.bf16.msra.mxu0 %v354
        %452 = vmatprep.subr.bf16.mxu0 %v357
        %453 = vmatpush1.bf16.msra.mxu0 %v356
        %454 = vmatprep.subr.bf16.mxu0 %v359
        %455 = vmatpush1.bf16.msra.mxu0 %v358
        %456 = vmatprep.subr.bf16.mxu0 %v361
        %457 = vmatpush1.bf16.msra.mxu0 %v360
        %458 = vmatprep.subr.bf16.mxu0 %v363
        %459 = vmatpush1.bf16.msra.mxu0 %v362
        %460 = vmatprep.subr.bf16.mxu0 %v365
        %461 = vmatpush1.bf16.msra.mxu0 %v364
        %462 = vmatprep.subr.bf16.mxu0 %v367
        %463 = vmatpush1.bf16.msra.mxu0 %v366
        %464 = vmatprep.subr.bf16.mxu0 %v369
        %465 = vmatpush1.bf16.msra.mxu0 %v368
        %466 = vmatprep.subr.bf16.mxu0 %v371
        %467 = vmatpush1.bf16.msra.mxu0 %v370
        %468 = vmatprep.subr.bf16.mxu0 %v373
        %469 = vmatpush1.bf16.msra.mxu0 %v372
        %470 = vmatprep.subr.bf16.mxu0 %v375
        %471 = vmatpush1.bf16.msra.mxu0 %v374
        %472 = vmatprep.subr.bf16.mxu0 %v377
        %473 = vmatpush1.bf16.msra.mxu0 %v376
        %474 = vmatprep.subr.bf16.mxu0 %v379
        %475 = vmatpush1.bf16.msra.mxu0 %v378
        %476 = vmatprep.mubr.bf16.mxu0 %v199
        %477 = vmatmul.mubr.bf16.gmra.mrb[0].mxu0 %v198
        %v478 = vpop.f32.mrb[0].mxu0
        %v479 = vadd.f32 0.0, %v478
        %v480 = vpop.f32.mrb[0].mxu0
        %v481 = vadd.f32 0.0, %v480
        %v482 = vpop.f32.mrb[0].mxu0
        %v483 = vpop.f32.mrb[0].mxu0
        %484 = vdwg.mxu0
        %485 = vmatprep.subr.bf16.mxu0 %v381
        %486 = vmatpush1.bf16.msra.mxu0 %v380
        %487 = vmatprep.subr.bf16.mxu0 %v383
        %488 = vmatpush1.bf16.msra.mxu0 %v382
        %489 = vmatprep.subr.bf16.mxu0 %v385
        %490 = vmatpush1.bf16.msra.mxu0 %v384
        %491 = vmatprep.subr.bf16.mxu0 %v387
        %492 = vmatpush1.bf16.msra.mxu0 %v386
        %493 = vmatprep.subr.bf16.mxu0 %v389
        %494 = vmatpush1.bf16.msra.mxu0 %v388
        %495 = vmatprep.subr.bf16.mxu0 %v391
        %496 = vmatpush1.bf16.msra.mxu0 %v390
        %497 = vmatprep.subr.bf16.mxu0 %v393
        %498 = vmatpush1.bf16.msra.mxu0 %v392
        %499 = vmatprep.subr.bf16.mxu0 %v395
        %500 = vmatpush1.bf16.msra.mxu0 %v394
        %501 = vmatprep.subr.bf16.mxu0 0
        %502 = vmatpush1.bf16.msra.mxu0 0
        %503 = vmatprep.subr.bf16.mxu0 0
        %504 = vmatpush1.bf16.msra.mxu0 0
        %505 = vmatprep.subr.bf16.mxu0 0
        %506 = vmatpush1.bf16.msra.mxu0 0
        %507 = vmatprep.subr.bf16.mxu0 0
        %508 = vmatpush1.bf16.msra.mxu0 0
        %509 = vmatprep.subr.bf16.mxu0 0
        %510 = vmatpush1.bf16.msra.mxu0 0
        %511 = vmatprep.subr.bf16.mxu0 0
        %512 = vmatpush1.bf16.msra.mxu0 0
        %513 = vmatprep.subr.bf16.mxu0 0
        %514 = vmatpush1.bf16.msra.mxu0 0
        %515 = vmatprep.subr.bf16.mxu0 0
        %516 = vmatpush1.bf16.msra.mxu0 0
        %517 = vmatprep.mubr.bf16.mxu0 0
        %518 = vmatmul.mubr.bf16.gmra.mrb[0].mxu0 %v200
        %v519 = vpop.f32.mrb[0].mxu0
        %v520 = vadd.f32 %v479, %v519
        %v521 = vpop.f32.mrb[0].mxu0
        %v522 = vadd.f32 %v481, %v521
        %v523 = vpop.f32.mrb[0].mxu0
        %v524 = vpop.f32.mrb[0].mxu0
        %525 = vdwg.mxu0
        %v526 = vmul.f32 %v520, 0.125
        %v527 = vpack.c.bf16 %v526, %v526
        %v528 = vpack.c.bf16 %v520, %v520
        %530 = vrot.lane.b32.xlu0 %v527, 64
        %v531 = vpop.permute.xlu0 %530
        %vm532 = vcmask 523264
        %v534 = vsel %vm532, %v531, 0
        %v537 = vsel %vm532, %v528, 0
        %539 = vmatprep.subr.bf16.mxu0 0
        %540 = vmatpush1.bf16.xpose.msra.mxu0 %v537
        %541 = vmatprep.subr.bf16.mxu0 0
        %542 = vmatpush1.bf16.xpose.msra.mxu0 0
        %543 = vmatprep.subr.bf16.mxu0 0
        %544 = vmatpush1.bf16.xpose.msra.mxu0 0
        %545 = vmatprep.subr.bf16.mxu0 0
        %546 = vmatpush1.bf16.xpose.msra.mxu0 0
        %547 = vmatprep.subr.bf16.mxu0 0
        %548 = vmatpush1.bf16.xpose.msra.mxu0 0
        %549 = vmatprep.subr.bf16.mxu0 0
        %550 = vmatpush1.bf16.xpose.msra.mxu0 0
        %551 = vmatprep.subr.bf16.mxu0 0
        %552 = vmatpush1.bf16.xpose.msra.mxu0 0
        %553 = vmatprep.subr.bf16.mxu0 0
        %554 = vmatpush1.bf16.xpose.msra.mxu0 0
        %555 = vmatprep.subr.bf16.mxu0 0
        %556 = vmatpush1.bf16.xpose.msra.mxu0 0
        %557 = vmatprep.subr.bf16.mxu0 0
        %558 = vmatpush1.bf16.xpose.msra.mxu0 0
        %559 = vmatprep.subr.bf16.mxu0 0
        %560 = vmatpush1.bf16.xpose.msra.mxu0 0
        %561 = vmatprep.subr.bf16.mxu0 0
        %562 = vmatpush1.bf16.xpose.msra.mxu0 0
        %563 = vmatprep.subr.bf16.mxu0 0
        %564 = vmatpush1.bf16.xpose.msra.mxu0 0
        %565 = vmatprep.subr.bf16.mxu0 0
        %566 = vmatpush1.bf16.xpose.msra.mxu0 0
        %567 = vmatprep.subr.bf16.mxu0 0
        %568 = vmatpush1.bf16.xpose.msra.mxu0 0
        %569 = vmatprep.subr.bf16.mxu0 0
        %570 = vmatpush1.bf16.xpose.msra.mxu0 0
        %571 = vmatprep.mubr.bf16.mxu0 0
        %572 = vmatmul.mubr.bf16.gmra.mrb[0].mxu0 %v534
        %v573 = vpop.f32.mrb[0].mxu0
        %v574 = vadd.f32 0.0, %v573
        %v575 = vpop.f32.mrb[0].mxu0
        %v576 = vpop.f32.mrb[0].mxu0
        %v577 = vpop.f32.mrb[0].mxu0
        %578 = vdwg.mxu0
        %v579 = vlaneseq
        %v580 = vshrl.u32 %v579, 7
        %v581 = vlaneseq
        %v582 = vand.u32 %v581, 127
        %vm583 = vcmp.le.s32.totalorder %v582, %v580
        %v584 = vsel %vm583, %v574, -inf
        %vm585 = vcmask 64512
        %v586 = vsel %vm585, %v584, -inf
        %587 = vmax.xlane.f32.xlu0 %v586
        %v588 = vpop.xlane.xlu0 %587
        %v589 = vsub.f32 %v584, %v588
        %v590 = vmul.f32 %v589, 1.442695
        %v591 = vpow.pop %v590
        %v592 = vsel %vm585, %v591, 0.0
        %593 = vadd.xlane.f32.xlu0 %v592
        %v594 = vpop.xlane.xlu0 %593
        %v595 = vrcp.pop %v594
        %v596 = vmul.f32 %v591, %v595
        %v597 = vpack.c.bf16 %v596, %v596
        %v598 = vpack.c.bf16 %v522, %v522
        %v600 = vsel %vm585, %v597, 0
        %vm602 = vcmask 1043456
        %v604 = vsel %vm602, %v598, 0
        %606 = vmatprep.subr.bf16.mxu0 0
        %607 = vmatpush1.bf16.msra.mxu0 %v604
        %608 = vmatprep.subr.bf16.mxu0 0
        %609 = vmatpush1.bf16.msra.mxu0 0
        %610 = vmatprep.subr.bf16.mxu0 0
        %611 = vmatpush1.bf16.msra.mxu0 0
        %612 = vmatprep.subr.bf16.mxu0 0
        %613 = vmatpush1.bf16.msra.mxu0 0
        %614 = vmatprep.subr.bf16.mxu0 0
        %615 = vmatpush1.bf16.msra.mxu0 0
        %616 = vmatprep.subr.bf16.mxu0 0
        %617 = vmatpush1.bf16.msra.mxu0 0
        %618 = vmatprep.subr.bf16.mxu0 0
        %619 = vmatpush1.bf16.msra.mxu0 0
        %620 = vmatprep.subr.bf16.mxu0 0
        %621 = vmatpush1.bf16.msra.mxu0 0
        %622 = vmatprep.subr.bf16.mxu0 0
        %623 = vmatpush1.bf16.msra.mxu0 0
        %624 = vmatprep.subr.bf16.mxu0 0
        %625 = vmatpush1.bf16.msra.mxu0 0
        %626 = vmatprep.subr.bf16.mxu0 0
        %627 = vmatpush1.bf16.msra.mxu0 0
        %628 = vmatprep.subr.bf16.mxu0 0
        %629 = vmatpush1.bf16.msra.mxu0 0
        %630 = vmatprep.subr.bf16.mxu0 0
        %631 = vmatpush1.bf16.msra.mxu0 0
        %632 = vmatprep.subr.bf16.mxu0 0
        %633 = vmatpush1.bf16.msra.mxu0 0
        %634 = vmatprep.subr.bf16.mxu0 0
        %635 = vmatpush1.bf16.msra.mxu0 0
        %636 = vmatprep.subr.bf16.mxu0 0
        %637 = vmatpush1.bf16.msra.mxu0 0
        %638 = vmatprep.mubr.bf16.mxu0 0
        %639 = vmatmul.mubr.bf16.gmra.mrb[0].mxu0 %v600
        %v640 = vpop.f32.mrb[0].mxu0
        %v641 = vadd.f32 0.0, %v640
        %v642 = vpop.f32.mrb[0].mxu0
        %v643 = vpop.f32.mrb[0].mxu0
        %v644 = vpop.f32.mrb[0].mxu0
        %645 = vdwg.mxu0
        %646 = vst.msk [vmem:[%s136] sm:$0xff] %vm532, %v641
        %s647 = sand.u32 %s71, 1
        %s648 = scalar_lea.sflag [#allocation3], %s647
        %s649 = sand.u32 %s71, 1
        %s650 = smul.addr %s649, 8
        %s651 = scalar_lea.vmem [#allocation2], %s650
        // Predicated region
        $region29: #{tpu_custom_call.1} parent=27 // pred_check
          %p652 = pneg %p81
        $region30: #{tpu_custom_call.1} parent=27 // pred_check_branch
          %654 = sbr.rel (%p652) target = $region32
        $region31: #{tpu_custom_call.1} parent=27 // pred_region
          %s656 = ssub.s32 128, 128
          %657 = vsyncadd %s648, %s656
          %s658 = smul.addr %s16, 128
          %s659 = scalar_lea.hbm %s2, %s658
          %s661 = sshll.u32 %s651, 4
          %s662 = int_to_ptr.vmem [resolvable:$true] %s661
          %664 = dma.vmem_to_hbm [thread:$0]  %s662, 128, %s659, %s648
        $region32: #{tpu_custom_call.1} parent=27 // pred_fallthru
          _
      $region28: #{tpu_custom_call.1} parent=5 // pred_fallthru
        _
      %p665 = scmp.le.s32.totalorder 2, %s11
      // Predicated region
      $region33: #{tpu_custom_call.1} parent=5 // pred_check
        %p666 = pneg %p665
      $region34: #{tpu_custom_call.1} parent=5 // pred_check_branch
        %668 = sbr.rel (%p666) target = $region36
      $region35: #{tpu_custom_call.1} parent=5 // pred_region
        %s669 = ssub.s32 %s11, 2
        // Predicated region
        $region37: #{tpu_custom_call.1} parent=35 // pred_check
          %p670 = pneg %p87
        $region38: #{tpu_custom_call.1} parent=35 // pred_check_branch
          %672 = sbr.rel (%p670) target = $region40
        $region39: #{tpu_custom_call.1} parent=35 // pred_region
          %s673 = sand.u32 %s72, 1
          %s674 = scalar_lea.sflag [#allocation3], %s673
          %s675 = sand.u32 %s72, 1
          %s676 = smul.addr %s675, 8
          %s677 = scalar_lea.vmem [#allocation2], %s676
          %678 = dma.done %s674, 128
        $region40: #{tpu_custom_call.1} parent=35 // pred_fallthru
          _
      $region36: #{tpu_custom_call.1} parent=5 // pred_fallthru
        _
    $region6: #{tpu_custom_call.1} parent=1 // loop_footer
      %s15 = sadd.s32 1, %s11
    $region7: #{tpu_custom_call.1} parent=1 // loop_footer_branch
      %10 = sbr.rel target = $region3
    $region8: #{tpu_custom_call.1} parent=1 // loop_exit
      _
    %679 = vsyncpa [#allocation3], 1
    %s680 = scalar_lea.sflag [#allocation3], 1
    %681 = vsyncpa %s680, 1

</llo_original>
